<compile_context>
chip_gen: v5e
topology: v5e:2x2
jax: 0.10.0
libtpu: 0.0.40
codegen_flags: <defaults>
</compile_context>

<pallas_src>
import functools

import jax
import jax.numpy as jnp
from jax.experimental import pallas as pl
from jax.experimental.pallas import tpu as pltpu


def gru_fc_kernel(ids_ref, m_ref, whh_ref, b_hn_ref, wfc_ref, bfc_ref, out_ref,
                  *, c_valid):
    """Fused embedding+input-projection -> GRU over time -> FC -> ReLU -> masked Softmax.

    ids_ref : (T*Bp, 1) int32  time-major flattened token ids (row t*Bp + b = x_in[b, t])
    m_ref   : (V, 3H)          emb @ W_ih^T with biases folded in, gate order [r | z | n]
    whh_ref : (H, 3H)          W_hh^T concatenated per gate [r | z | n]
    b_hn_ref: (1, H)           b_hh_n (must stay inside the step: n-gate needs r*(gh_n+b_hn))
    wfc_ref : (H, C_pad)       fc_1 weight, transposed, zero-padded to 128 lanes
    bfc_ref : (1, C_pad)       fc_1 bias, zero-padded
    out_ref : (Bp, C_pad)      softmax probabilities (padded lanes / padded batch rows unused)
    """
    TB = ids_ref.shape[0]
    Bp = out_ref.shape[0]
    T = TB // Bp
    H = whh_ref.shape[0]
    V = m_ref.shape[0]

    # ---- Embedding + hoisted input projection fused into ONE MXU push (off the chain) ----
    ids = ids_ref[...]                                                    # (T*Bp, 1) int32
    vocab_iota = jax.lax.broadcasted_iota(jnp.int32, (TB, V), 1)
    onehot = (vocab_iota == ids).astype(m_ref.dtype)                      # (T*Bp, V) bf16
    gi_all = jnp.dot(onehot, m_ref[...],
                     preferred_element_type=jnp.float32)                  # (T*Bp, 3H) f32

    # Hoist weight / bias loads out of the loop.
    whh = whh_ref[...]                                                    # (H, 3H)
    b_hn = b_hn_ref[...]                                                  # (1, H)

    # ---- Serial GRU recurrence: one MXU push + f32 elementwise per timestep ----
    h = jnp.zeros((Bp, H), jnp.float32)
    for t in range(T):                                   # T static -> fully unrolled
        gi = gi_all[t * Bp:(t + 1) * Bp, :]              # static, sublane-aligned slice
        gh = jnp.dot(h.astype(whh.dtype), whh,
                     preferred_element_type=jnp.float32)                  # (Bp, 3H)
        r = jax.nn.sigmoid(gi[:, 0:H] + gh[:, 0:H])
        z = jax.nn.sigmoid(gi[:, H:2 * H] + gh[:, H:2 * H])
        n = jnp.tanh(gi[:, 2 * H:3 * H] + r * (gh[:, 2 * H:3 * H] + b_hn))
        h = (1.0 - z) * n + z * h

    # ---- FC -> ReLU -> Softmax over the first c_valid lanes (lane-dense 128-wide store) ----
    logits = jnp.dot(h.astype(wfc_ref.dtype), wfc_ref[...],
                     preferred_element_type=jnp.float32) + bfc_ref[...]   # (Bp, C_pad)
    act = jnp.maximum(logits, 0.0)                                        # ReLU (as in the module)
    lane = jax.lax.broadcasted_iota(jnp.int32, act.shape, 1)
    act = jnp.where(lane < c_valid, act, jnp.float32(-1e30))              # mask padded classes
    m_max = jnp.max(act, axis=1, keepdims=True)
    e = jnp.exp(act - m_max)
    denom = jnp.sum(e, axis=1, keepdims=True)
    out_ref[...] = e * pl.reciprocal(denom, approx=False)                 # exact softmax


def init_params(key, char_embedding_dim, char_vocab_size, rnn_hidden_size,
                nb_categories, padding_idx):
    """Deterministic synthetic parameters (shapes match the nn.Module __init__)."""
    E, V, H, C = char_embedding_dim, char_vocab_size, rnn_hidden_size, nb_categories
    ks = jax.random.split(key, 7)
    scale = 0.1
    emb_table = scale * jax.random.normal(ks[0], (V, E), jnp.float32)
    emb_table = emb_table.at[padding_idx].set(0.0)       # nn.Embedding(padding_idx=...) zeroes row
    w_ih = scale * jax.random.normal(ks[1], (3 * H, E), jnp.float32)   # gate order r, z, n
    w_hh = scale * jax.random.normal(ks[2], (3 * H, H), jnp.float32)
    b_ih = scale * jax.random.normal(ks[3], (3 * H,), jnp.float32)
    b_hh = scale * jax.random.normal(ks[4], (3 * H,), jnp.float32)
    w_fc = scale * jax.random.normal(ks[5], (C, H), jnp.float32)
    b_fc = scale * jax.random.normal(ks[6], (C,), jnp.float32)
    return dict(embedding=emb_table, w_ih=w_ih, w_hh=w_hh, b_ih=b_ih,
                b_hh=b_hh, w_fc=w_fc, b_fc=b_fc)


def prepare_params(params, compute_dtype=jnp.bfloat16, c_pad=128):
    """One-time weight folding into kernel-ready layout (done once, outside the hot path)."""
    H = params["w_hh"].shape[1]
    C = params["w_fc"].shape[0]
    emb = params["embedding"].astype(jnp.float32)        # (V, E), padding row already zero
    w_ih = params["w_ih"].astype(jnp.float32)            # (3H, E) gate order r, z, n
    w_hh = params["w_hh"].astype(jnp.float32)            # (3H, H)
    b_ih = params["b_ih"].astype(jnp.float32)
    b_hh = params["b_hh"].astype(jnp.float32)

    # M[v] = emb[v] @ W_ih^T + [b_ir+b_hr | b_iz+b_hz | b_in]   (b_hh_n stays in the kernel)
    bias_row = jnp.concatenate([b_ih[0:H] + b_hh[0:H],
                                b_ih[H:2 * H] + b_hh[H:2 * H],
                                b_ih[2 * H:3 * H]])                        # (3H,)
    m_table = emb @ w_ih.T + bias_row[None, :]                             # (V, 3H) f32

    wfc = jnp.zeros((H, c_pad), jnp.float32).at[:, :C].set(params["w_fc"].T)
    bfc = jnp.zeros((1, c_pad), jnp.float32).at[0, :C].set(params["b_fc"])

    return dict(
        m=m_table.astype(compute_dtype),                 # (V, 3H)
        whh=w_hh.T.astype(compute_dtype),                # (H, 3H), columns [r | z | n]
        b_hn=b_hh[2 * H:3 * H].reshape(1, H),            # f32
        wfc=wfc.astype(compute_dtype),                   # (H, 128)
        bfc=bfc,                                         # (1, 128) f32
    )


@functools.partial(jax.jit, static_argnames=("nb_categories",))
def surname_classifier_forward(x_in, kp, *, nb_categories):
    """x_in: (B, T) int32 token ids -> (B, nb_categories) softmax probabilities."""
    B, T = x_in.shape
    C_pad = kp["wfc"].shape[-1]

    # Pad batch to a sublane multiple (8) so every vector op / store is unmasked and
    # every t*Bp row offset is tile-aligned; padded rows are discarded after the call.
    Bp = ((B + 7) // 8) * 8
    ids_tm = jnp.transpose(x_in).astype(jnp.int32)                        # (T, B) time-major
    if Bp != B:
        ids_tm = jnp.pad(ids_tm, ((0, 0), (0, Bp - B)))                   # padded ids = 0
    ids_tm = ids_tm.reshape(T * Bp, 1)

    vmem = pl.BlockSpec(memory_space=pltpu.MemorySpace.VMEM)
    kernel = functools.partial(gru_fc_kernel, c_valid=nb_categories)
    out_padded = pl.pallas_call(
        kernel,
        out_shape=jax.ShapeDtypeStruct((Bp, C_pad), jnp.float32),
        in_specs=[vmem] * 6,
        out_specs=vmem,
    )(ids_tm, kp["m"], kp["whh"], kp["b_hn"], kp["wfc"], kp["bfc"])
    return out_padded[:B, :nb_categories]


def reference_forward(x_in, params):
    """Pure-JAX reference of the PyTorch module forward (f32)."""
    H = params["w_hh"].shape[1]
    emb = jnp.take(params["embedding"], x_in, axis=0)    # (B, T, E)
    B, T, _ = emb.shape
    h = jnp.zeros((B, H), jnp.float32)
    for t in range(T):
        x_t = emb[:, t, :]
        gi = x_t @ params["w_ih"].T + params["b_ih"]
        gh = h @ params["w_hh"].T + params["b_hh"]
        r = jax.nn.sigmoid(gi[:, 0 * H:1 * H] + gh[:, 0 * H:1 * H])
        z = jax.nn.sigmoid(gi[:, 1 * H:2 * H] + gh[:, 1 * H:2 * H])
        n = jnp.tanh(gi[:, 2 * H:3 * H] + r * gh[:, 2 * H:3 * H])
        h = (1.0 - z) * n + z * h
    logits = h @ params["w_fc"].T + params["b_fc"]
    act = jnp.maximum(logits, 0.0)
    return jax.nn.softmax(act, axis=1)


if __name__ == "__main__":
    # Small shapes consistent with the module's forward.
    char_embedding_dim = 32
    char_vocab_size = 30
    rnn_hidden_size = 32
    nb_categories = 8
    padding_idx = 0
    batch, seq_len = 2, 8

    key = jax.random.PRNGKey(0)
    pkey, xkey = jax.random.split(key)
    params = init_params(pkey, char_embedding_dim, char_vocab_size,
                         rnn_hidden_size, nb_categories, padding_idx)

    # bf16 MXU operands on every TPU generation (v5e MXU is natively bf16; all elementwise
    # math and the hidden-state carry stay f32).
    kparams = prepare_params(params, compute_dtype=jnp.bfloat16)

    # Token ids in [1, vocab); last two positions padded with padding_idx.
    x_in = jax.random.randint(xkey, (batch, seq_len), 1, char_vocab_size,
                              dtype=jnp.int32)
    x_in = x_in.at[:, -2:].set(padding_idx)

    probs = surname_classifier_forward(x_in, kparams, nb_categories=nb_categories)
    probs = jax.block_until_ready(probs)

    ref = reference_forward(x_in, params)

    assert probs.shape == (batch, nb_categories)
    assert bool(jnp.all(jnp.isfinite(probs)))
    # Exact softmax divide -> rows sum to ~1 at f32 precision.
    assert bool(jnp.allclose(jnp.sum(probs, axis=1), 1.0, atol=1e-3))
    # Match the pure-JAX reference of the PyTorch forward (bf16 MXU operands => loose tol).
    assert bool(jnp.allclose(probs, ref, atol=2e-2)), (probs, ref)
    print("KERNEL_OK")
</pallas_src>

<mosaic_0001>
module attributes {stable_mosaic.version = 11 : i64} {
  func.func @gru_fc_kernel(%arg0: memref<64x1xi32, #tpu.memory_space<vmem>>, %arg1: memref<30x96xbf16, #tpu.memory_space<vmem>>, %arg2: memref<32x96xbf16, #tpu.memory_space<vmem>>, %arg3: memref<1x32xf32, #tpu.memory_space<vmem>>, %arg4: memref<32x128xbf16, #tpu.memory_space<vmem>>, %arg5: memref<1x128xf32, #tpu.memory_space<vmem>>, %arg6: memref<8x128xf32, #tpu.memory_space<vmem>>) attributes {dimension_semantics = [], scalar_prefetch = 0 : i64, scratch_operands = 0 : i64, tpu.core_type = #tpu.core_type<tc>} {
    %c0 = arith.constant 0 : index
    %c0_0 = arith.constant 0 : index
    %0 = vector.load %arg0[%c0, %c0_0] : memref<64x1xi32, #tpu.memory_space<vmem>>, vector<64x1xi32>
    %1 = tpu.iota {dimensions = array<i32: 1>} : vector<64x30xi32>
    %2 = vector.broadcast %0 : vector<64x1xi32> to vector<64x30xi32>
    %3 = arith.cmpi eq, %1, %2 : vector<64x30xi32>
    %4 = arith.extui %3 : vector<64x30xi1> to vector<64x30xi32>
    %5 = arith.sitofp %4 : vector<64x30xi32> to vector<64x30xf32>
    %6 = arith.truncf %5 : vector<64x30xf32> to vector<64x30xbf16>
    %c0_1 = arith.constant 0 : index
    %c0_2 = arith.constant 0 : index
    %7 = vector.load %arg1[%c0_1, %c0_2] : memref<30x96xbf16, #tpu.memory_space<vmem>>, vector<30x96xbf16>
    %cst = arith.constant dense<0.000000e+00> : vector<64x96xf32>
    %8 = tpu.matmul %6, %7, %cst {dimension_numbers = #tpu.dot_dimension_numbers<[1], [0], [0], [1], [0, 0, 1, 1], [], []>} : vector<64x30xbf16>, vector<30x96xbf16>, vector<64x96xf32> -> vector<64x96xf32>
    %c0_3 = arith.constant 0 : index
    %c0_4 = arith.constant 0 : index
    %9 = vector.load %arg2[%c0_3, %c0_4] : memref<32x96xbf16, #tpu.memory_space<vmem>>, vector<32x96xbf16>
    %c0_5 = arith.constant 0 : index
    %c0_6 = arith.constant 0 : index
    %10 = vector.load %arg3[%c0_5, %c0_6] : memref<1x32xf32, #tpu.memory_space<vmem>>, vector<1x32xf32>
    %cst_7 = arith.constant 0.000000e+00 : f32
    %11 = vector.broadcast %cst_7 : f32 to vector<8x32xf32>
    %12 = vector.extract_strided_slice %8 {offsets = [0, 0], sizes = [8, 96], strides = [1, 1]} : vector<64x96xf32> to vector<8x96xf32>
    %13 = arith.truncf %11 : vector<8x32xf32> to vector<8x32xbf16>
    %cst_8 = arith.constant dense<0.000000e+00> : vector<8x96xf32>
    %14 = tpu.matmul %13, %9, %cst_8 {dimension_numbers = #tpu.dot_dimension_numbers<[1], [0], [0], [1], [0, 0, 1, 1], [], []>} : vector<8x32xbf16>, vector<32x96xbf16>, vector<8x96xf32> -> vector<8x96xf32>
    %15 = vector.extract_strided_slice %12 {offsets = [0, 0], sizes = [8, 32], strides = [1, 1]} : vector<8x96xf32> to vector<8x32xf32>
    %16 = vector.extract_strided_slice %14 {offsets = [0, 0], sizes = [8, 32], strides = [1, 1]} : vector<8x96xf32> to vector<8x32xf32>
    %17 = arith.addf %15, %16 : vector<8x32xf32>
    %18 = arith.negf %17 : vector<8x32xf32>
    %19 = math.exp %18 : vector<8x32xf32>
    %cst_9 = arith.constant 1.000000e+00 : f32
    %20 = vector.broadcast %cst_9 : f32 to vector<8x32xf32>
    %21 = arith.addf %20, %19 : vector<8x32xf32>
    %22 = arith.divf %20, %21 : vector<8x32xf32>
    %23 = vector.extract_strided_slice %12 {offsets = [0, 32], sizes = [8, 32], strides = [1, 1]} : vector<8x96xf32> to vector<8x32xf32>
    %24 = vector.extract_strided_slice %14 {offsets = [0, 32], sizes = [8, 32], strides = [1, 1]} : vector<8x96xf32> to vector<8x32xf32>
    %25 = arith.addf %23, %24 : vector<8x32xf32>
    %26 = arith.negf %25 : vector<8x32xf32>
    %27 = math.exp %26 : vector<8x32xf32>
    %cst_10 = arith.constant 1.000000e+00 : f32
    %28 = vector.broadcast %cst_10 : f32 to vector<8x32xf32>
    %29 = arith.addf %28, %27 : vector<8x32xf32>
    %30 = arith.divf %28, %29 : vector<8x32xf32>
    %31 = vector.extract_strided_slice %12 {offsets = [0, 64], sizes = [8, 32], strides = [1, 1]} : vector<8x96xf32> to vector<8x32xf32>
    %32 = vector.extract_strided_slice %14 {offsets = [0, 64], sizes = [8, 32], strides = [1, 1]} : vector<8x96xf32> to vector<8x32xf32>
    %33 = vector.broadcast %10 : vector<1x32xf32> to vector<8x32xf32>
    %34 = arith.addf %32, %33 : vector<8x32xf32>
    %35 = arith.mulf %22, %34 : vector<8x32xf32>
    %36 = arith.addf %31, %35 : vector<8x32xf32>
    %37 = math.tanh %36 : vector<8x32xf32>
    %cst_11 = arith.constant 1.000000e+00 : f32
    %38 = vector.broadcast %cst_11 : f32 to vector<8x32xf32>
    %39 = arith.subf %38, %30 : vector<8x32xf32>
    %40 = arith.mulf %39, %37 : vector<8x32xf32>
    %41 = arith.mulf %30, %11 : vector<8x32xf32>
    %42 = arith.addf %40, %41 : vector<8x32xf32>
    %43 = vector.extract_strided_slice %8 {offsets = [8, 0], sizes = [8, 96], strides = [1, 1]} : vector<64x96xf32> to vector<8x96xf32>
    %44 = arith.truncf %42 : vector<8x32xf32> to vector<8x32xbf16>
    %cst_12 = arith.constant dense<0.000000e+00> : vector<8x96xf32>
    %45 = tpu.matmul %44, %9, %cst_12 {dimension_numbers = #tpu.dot_dimension_numbers<[1], [0], [0], [1], [0, 0, 1, 1], [], []>} : vector<8x32xbf16>, vector<32x96xbf16>, vector<8x96xf32> -> vector<8x96xf32>
    %46 = vector.extract_strided_slice %43 {offsets = [0, 0], sizes = [8, 32], strides = [1, 1]} : vector<8x96xf32> to vector<8x32xf32>
    %47 = vector.extract_strided_slice %45 {offsets = [0, 0], sizes = [8, 32], strides = [1, 1]} : vector<8x96xf32> to vector<8x32xf32>
    %48 = arith.addf %46, %47 : vector<8x32xf32>
    %49 = arith.negf %48 : vector<8x32xf32>
    %50 = math.exp %49 : vector<8x32xf32>
    %cst_13 = arith.constant 1.000000e+00 : f32
    %51 = vector.broadcast %cst_13 : f32 to vector<8x32xf32>
    %52 = arith.addf %51, %50 : vector<8x32xf32>
    %53 = arith.divf %51, %52 : vector<8x32xf32>
    %54 = vector.extract_strided_slice %43 {offsets = [0, 32], sizes = [8, 32], strides = [1, 1]} : vector<8x96xf32> to vector<8x32xf32>
    %55 = vector.extract_strided_slice %45 {offsets = [0, 32], sizes = [8, 32], strides = [1, 1]} : vector<8x96xf32> to vector<8x32xf32>
    %56 = arith.addf %54, %55 : vector<8x32xf32>
    %57 = arith.negf %56 : vector<8x32xf32>
    %58 = math.exp %57 : vector<8x32xf32>
    %cst_14 = arith.constant 1.000000e+00 : f32
    %59 = vector.broadcast %cst_14 : f32 to vector<8x32xf32>
    %60 = arith.addf %59, %58 : vector<8x32xf32>
    %61 = arith.divf %59, %60 : vector<8x32xf32>
    %62 = vector.extract_strided_slice %43 {offsets = [0, 64], sizes = [8, 32], strides = [1, 1]} : vector<8x96xf32> to vector<8x32xf32>
    %63 = vector.extract_strided_slice %45 {offsets = [0, 64], sizes = [8, 32], strides = [1, 1]} : vector<8x96xf32> to vector<8x32xf32>
    %64 = vector.broadcast %10 : vector<1x32xf32> to vector<8x32xf32>
    %65 = arith.addf %63, %64 : vector<8x32xf32>
    %66 = arith.mulf %53, %65 : vector<8x32xf32>
    %67 = arith.addf %62, %66 : vector<8x32xf32>
    %68 = math.tanh %67 : vector<8x32xf32>
    %cst_15 = arith.constant 1.000000e+00 : f32
    %69 = vector.broadcast %cst_15 : f32 to vector<8x32xf32>
    %70 = arith.subf %69, %61 : vector<8x32xf32>
    %71 = arith.mulf %70, %68 : vector<8x32xf32>
    %72 = arith.mulf %61, %42 : vector<8x32xf32>
    %73 = arith.addf %71, %72 : vector<8x32xf32>
    %74 = vector.extract_strided_slice %8 {offsets = [16, 0], sizes = [8, 96], strides = [1, 1]} : vector<64x96xf32> to vector<8x96xf32>
    %75 = arith.truncf %73 : vector<8x32xf32> to vector<8x32xbf16>
    %cst_16 = arith.constant dense<0.000000e+00> : vector<8x96xf32>
    %76 = tpu.matmul %75, %9, %cst_16 {dimension_numbers = #tpu.dot_dimension_numbers<[1], [0], [0], [1], [0, 0, 1, 1], [], []>} : vector<8x32xbf16>, vector<32x96xbf16>, vector<8x96xf32> -> vector<8x96xf32>
    %77 = vector.extract_strided_slice %74 {offsets = [0, 0], sizes = [8, 32], strides = [1, 1]} : vector<8x96xf32> to vector<8x32xf32>
    %78 = vector.extract_strided_slice %76 {offsets = [0, 0], sizes = [8, 32], strides = [1, 1]} : vector<8x96xf32> to vector<8x32xf32>
    %79 = arith.addf %77, %78 : vector<8x32xf32>
    %80 = arith.negf %79 : vector<8x32xf32>
    %81 = math.exp %80 : vector<8x32xf32>
    %cst_17 = arith.constant 1.000000e+00 : f32
    %82 = vector.broadcast %cst_17 : f32 to vector<8x32xf32>
    %83 = arith.addf %82, %81 : vector<8x32xf32>
    %84 = arith.divf %82, %83 : vector<8x32xf32>
    %85 = vector.extract_strided_slice %74 {offsets = [0, 32], sizes = [8, 32], strides = [1, 1]} : vector<8x96xf32> to vector<8x32xf32>
    %86 = vector.extract_strided_slice %76 {offsets = [0, 32], sizes = [8, 32], strides = [1, 1]} : vector<8x96xf32> to vector<8x32xf32>
    %87 = arith.addf %85, %86 : vector<8x32xf32>
    %88 = arith.negf %87 : vector<8x32xf32>
    %89 = math.exp %88 : vector<8x32xf32>
    %cst_18 = arith.constant 1.000000e+00 : f32
    %90 = vector.broadcast %cst_18 : f32 to vector<8x32xf32>
    %91 = arith.addf %90, %89 : vector<8x32xf32>
    %92 = arith.divf %90, %91 : vector<8x32xf32>
    %93 = vector.extract_strided_slice %74 {offsets = [0, 64], sizes = [8, 32], strides = [1, 1]} : vector<8x96xf32> to vector<8x32xf32>
    %94 = vector.extract_strided_slice %76 {offsets = [0, 64], sizes = [8, 32], strides = [1, 1]} : vector<8x96xf32> to vector<8x32xf32>
    %95 = vector.broadcast %10 : vector<1x32xf32> to vector<8x32xf32>
    %96 = arith.addf %94, %95 : vector<8x32xf32>
    %97 = arith.mulf %84, %96 : vector<8x32xf32>
    %98 = arith.addf %93, %97 : vector<8x32xf32>
    %99 = math.tanh %98 : vector<8x32xf32>
    %cst_19 = arith.constant 1.000000e+00 : f32
    %100 = vector.broadcast %cst_19 : f32 to vector<8x32xf32>
    %101 = arith.subf %100, %92 : vector<8x32xf32>
    %102 = arith.mulf %101, %99 : vector<8x32xf32>
    %103 = arith.mulf %92, %73 : vector<8x32xf32>
    %104 = arith.addf %102, %103 : vector<8x32xf32>
    %105 = vector.extract_strided_slice %8 {offsets = [24, 0], sizes = [8, 96], strides = [1, 1]} : vector<64x96xf32> to vector<8x96xf32>
    %106 = arith.truncf %104 : vector<8x32xf32> to vector<8x32xbf16>
    %cst_20 = arith.constant dense<0.000000e+00> : vector<8x96xf32>
    %107 = tpu.matmul %106, %9, %cst_20 {dimension_numbers = #tpu.dot_dimension_numbers<[1], [0], [0], [1], [0, 0, 1, 1], [], []>} : vector<8x32xbf16>, vector<32x96xbf16>, vector<8x96xf32> -> vector<8x96xf32>
    %108 = vector.extract_strided_slice %105 {offsets = [0, 0], sizes = [8, 32], strides = [1, 1]} : vector<8x96xf32> to vector<8x32xf32>
    %109 = vector.extract_strided_slice %107 {offsets = [0, 0], sizes = [8, 32], strides = [1, 1]} : vector<8x96xf32> to vector<8x32xf32>
    %110 = arith.addf %108, %109 : vector<8x32xf32>
    %111 = arith.negf %110 : vector<8x32xf32>
    %112 = math.exp %111 : vector<8x32xf32>
    %cst_21 = arith.constant 1.000000e+00 : f32
    %113 = vector.broadcast %cst_21 : f32 to vector<8x32xf32>
    %114 = arith.addf %113, %112 : vector<8x32xf32>
    %115 = arith.divf %113, %114 : vector<8x32xf32>
    %116 = vector.extract_strided_slice %105 {offsets = [0, 32], sizes = [8, 32], strides = [1, 1]} : vector<8x96xf32> to vector<8x32xf32>
    %117 = vector.extract_strided_slice %107 {offsets = [0, 32], sizes = [8, 32], strides = [1, 1]} : vector<8x96xf32> to vector<8x32xf32>
    %118 = arith.addf %116, %117 : vector<8x32xf32>
    %119 = arith.negf %118 : vector<8x32xf32>
    %120 = math.exp %119 : vector<8x32xf32>
    %cst_22 = arith.constant 1.000000e+00 : f32
    %121 = vector.broadcast %cst_22 : f32 to vector<8x32xf32>
    %122 = arith.addf %121, %120 : vector<8x32xf32>
    %123 = arith.divf %121, %122 : vector<8x32xf32>
    %124 = vector.extract_strided_slice %105 {offsets = [0, 64], sizes = [8, 32], strides = [1, 1]} : vector<8x96xf32> to vector<8x32xf32>
    %125 = vector.extract_strided_slice %107 {offsets = [0, 64], sizes = [8, 32], strides = [1, 1]} : vector<8x96xf32> to vector<8x32xf32>
    %126 = vector.broadcast %10 : vector<1x32xf32> to vector<8x32xf32>
    %127 = arith.addf %125, %126 : vector<8x32xf32>
    %128 = arith.mulf %115, %127 : vector<8x32xf32>
    %129 = arith.addf %124, %128 : vector<8x32xf32>
    %130 = math.tanh %129 : vector<8x32xf32>
    %cst_23 = arith.constant 1.000000e+00 : f32
    %131 = vector.broadcast %cst_23 : f32 to vector<8x32xf32>
    %132 = arith.subf %131, %123 : vector<8x32xf32>
    %133 = arith.mulf %132, %130 : vector<8x32xf32>
    %134 = arith.mulf %123, %104 : vector<8x32xf32>
    %135 = arith.addf %133, %134 : vector<8x32xf32>
    %136 = vector.extract_strided_slice %8 {offsets = [32, 0], sizes = [8, 96], strides = [1, 1]} : vector<64x96xf32> to vector<8x96xf32>
    %137 = arith.truncf %135 : vector<8x32xf32> to vector<8x32xbf16>
    %cst_24 = arith.constant dense<0.000000e+00> : vector<8x96xf32>
    %138 = tpu.matmul %137, %9, %cst_24 {dimension_numbers = #tpu.dot_dimension_numbers<[1], [0], [0], [1], [0, 0, 1, 1], [], []>} : vector<8x32xbf16>, vector<32x96xbf16>, vector<8x96xf32> -> vector<8x96xf32>
    %139 = vector.extract_strided_slice %136 {offsets = [0, 0], sizes = [8, 32], strides = [1, 1]} : vector<8x96xf32> to vector<8x32xf32>
    %140 = vector.extract_strided_slice %138 {offsets = [0, 0], sizes = [8, 32], strides = [1, 1]} : vector<8x96xf32> to vector<8x32xf32>
    %141 = arith.addf %139, %140 : vector<8x32xf32>
    %142 = arith.negf %141 : vector<8x32xf32>
    %143 = math.exp %142 : vector<8x32xf32>
    %cst_25 = arith.constant 1.000000e+00 : f32
    %144 = vector.broadcast %cst_25 : f32 to vector<8x32xf32>
    %145 = arith.addf %144, %143 : vector<8x32xf32>
    %146 = arith.divf %144, %145 : vector<8x32xf32>
    %147 = vector.extract_strided_slice %136 {offsets = [0, 32], sizes = [8, 32], strides = [1, 1]} : vector<8x96xf32> to vector<8x32xf32>
    %148 = vector.extract_strided_slice %138 {offsets = [0, 32], sizes = [8, 32], strides = [1, 1]} : vector<8x96xf32> to vector<8x32xf32>
    %149 = arith.addf %147, %148 : vector<8x32xf32>
    %150 = arith.negf %149 : vector<8x32xf32>
    %151 = math.exp %150 : vector<8x32xf32>
    %cst_26 = arith.constant 1.000000e+00 : f32
    %152 = vector.broadcast %cst_26 : f32 to vector<8x32xf32>
    %153 = arith.addf %152, %151 : vector<8x32xf32>
    %154 = arith.divf %152, %153 : vector<8x32xf32>
    %155 = vector.extract_strided_slice %136 {offsets = [0, 64], sizes = [8, 32], strides = [1, 1]} : vector<8x96xf32> to vector<8x32xf32>
    %156 = vector.extract_strided_slice %138 {offsets = [0, 64], sizes = [8, 32], strides = [1, 1]} : vector<8x96xf32> to vector<8x32xf32>
    %157 = vector.broadcast %10 : vector<1x32xf32> to vector<8x32xf32>
    %158 = arith.addf %156, %157 : vector<8x32xf32>
    %159 = arith.mulf %146, %158 : vector<8x32xf32>
    %160 = arith.addf %155, %159 : vector<8x32xf32>
    %161 = math.tanh %160 : vector<8x32xf32>
    %cst_27 = arith.constant 1.000000e+00 : f32
    %162 = vector.broadcast %cst_27 : f32 to vector<8x32xf32>
    %163 = arith.subf %162, %154 : vector<8x32xf32>
    %164 = arith.mulf %163, %161 : vector<8x32xf32>
    %165 = arith.mulf %154, %135 : vector<8x32xf32>
    %166 = arith.addf %164, %165 : vector<8x32xf32>
    %167 = vector.extract_strided_slice %8 {offsets = [40, 0], sizes = [8, 96], strides = [1, 1]} : vector<64x96xf32> to vector<8x96xf32>
    %168 = arith.truncf %166 : vector<8x32xf32> to vector<8x32xbf16>
    %cst_28 = arith.constant dense<0.000000e+00> : vector<8x96xf32>
    %169 = tpu.matmul %168, %9, %cst_28 {dimension_numbers = #tpu.dot_dimension_numbers<[1], [0], [0], [1], [0, 0, 1, 1], [], []>} : vector<8x32xbf16>, vector<32x96xbf16>, vector<8x96xf32> -> vector<8x96xf32>
    %170 = vector.extract_strided_slice %167 {offsets = [0, 0], sizes = [8, 32], strides = [1, 1]} : vector<8x96xf32> to vector<8x32xf32>
    %171 = vector.extract_strided_slice %169 {offsets = [0, 0], sizes = [8, 32], strides = [1, 1]} : vector<8x96xf32> to vector<8x32xf32>
    %172 = arith.addf %170, %171 : vector<8x32xf32>
    %173 = arith.negf %172 : vector<8x32xf32>
    %174 = math.exp %173 : vector<8x32xf32>
    %cst_29 = arith.constant 1.000000e+00 : f32
    %175 = vector.broadcast %cst_29 : f32 to vector<8x32xf32>
    %176 = arith.addf %175, %174 : vector<8x32xf32>
    %177 = arith.divf %175, %176 : vector<8x32xf32>
    %178 = vector.extract_strided_slice %167 {offsets = [0, 32], sizes = [8, 32], strides = [1, 1]} : vector<8x96xf32> to vector<8x32xf32>
    %179 = vector.extract_strided_slice %169 {offsets = [0, 32], sizes = [8, 32], strides = [1, 1]} : vector<8x96xf32> to vector<8x32xf32>
    %180 = arith.addf %178, %179 : vector<8x32xf32>
    %181 = arith.negf %180 : vector<8x32xf32>
    %182 = math.exp %181 : vector<8x32xf32>
    %cst_30 = arith.constant 1.000000e+00 : f32
    %183 = vector.broadcast %cst_30 : f32 to vector<8x32xf32>
    %184 = arith.addf %183, %182 : vector<8x32xf32>
    %185 = arith.divf %183, %184 : vector<8x32xf32>
    %186 = vector.extract_strided_slice %167 {offsets = [0, 64], sizes = [8, 32], strides = [1, 1]} : vector<8x96xf32> to vector<8x32xf32>
    %187 = vector.extract_strided_slice %169 {offsets = [0, 64], sizes = [8, 32], strides = [1, 1]} : vector<8x96xf32> to vector<8x32xf32>
    %188 = vector.broadcast %10 : vector<1x32xf32> to vector<8x32xf32>
    %189 = arith.addf %187, %188 : vector<8x32xf32>
    %190 = arith.mulf %177, %189 : vector<8x32xf32>
    %191 = arith.addf %186, %190 : vector<8x32xf32>
    %192 = math.tanh %191 : vector<8x32xf32>
    %cst_31 = arith.constant 1.000000e+00 : f32
    %193 = vector.broadcast %cst_31 : f32 to vector<8x32xf32>
    %194 = arith.subf %193, %185 : vector<8x32xf32>
    %195 = arith.mulf %194, %192 : vector<8x32xf32>
    %196 = arith.mulf %185, %166 : vector<8x32xf32>
    %197 = arith.addf %195, %196 : vector<8x32xf32>
    %198 = vector.extract_strided_slice %8 {offsets = [48, 0], sizes = [8, 96], strides = [1, 1]} : vector<64x96xf32> to vector<8x96xf32>
    %199 = arith.truncf %197 : vector<8x32xf32> to vector<8x32xbf16>
    %cst_32 = arith.constant dense<0.000000e+00> : vector<8x96xf32>
    %200 = tpu.matmul %199, %9, %cst_32 {dimension_numbers = #tpu.dot_dimension_numbers<[1], [0], [0], [1], [0, 0, 1, 1], [], []>} : vector<8x32xbf16>, vector<32x96xbf16>, vector<8x96xf32> -> vector<8x96xf32>
    %201 = vector.extract_strided_slice %198 {offsets = [0, 0], sizes = [8, 32], strides = [1, 1]} : vector<8x96xf32> to vector<8x32xf32>
    %202 = vector.extract_strided_slice %200 {offsets = [0, 0], sizes = [8, 32], strides = [1, 1]} : vector<8x96xf32> to vector<8x32xf32>
    %203 = arith.addf %201, %202 : vector<8x32xf32>
    %204 = arith.negf %203 : vector<8x32xf32>
    %205 = math.exp %204 : vector<8x32xf32>
    %cst_33 = arith.constant 1.000000e+00 : f32
    %206 = vector.broadcast %cst_33 : f32 to vector<8x32xf32>
    %207 = arith.addf %206, %205 : vector<8x32xf32>
    %208 = arith.divf %206, %207 : vector<8x32xf32>
    %209 = vector.extract_strided_slice %198 {offsets = [0, 32], sizes = [8, 32], strides = [1, 1]} : vector<8x96xf32> to vector<8x32xf32>
    %210 = vector.extract_strided_slice %200 {offsets = [0, 32], sizes = [8, 32], strides = [1, 1]} : vector<8x96xf32> to vector<8x32xf32>
    %211 = arith.addf %209, %210 : vector<8x32xf32>
    %212 = arith.negf %211 : vector<8x32xf32>
    %213 = math.exp %212 : vector<8x32xf32>
    %cst_34 = arith.constant 1.000000e+00 : f32
    %214 = vector.broadcast %cst_34 : f32 to vector<8x32xf32>
    %215 = arith.addf %214, %213 : vector<8x32xf32>
    %216 = arith.divf %214, %215 : vector<8x32xf32>
    %217 = vector.extract_strided_slice %198 {offsets = [0, 64], sizes = [8, 32], strides = [1, 1]} : vector<8x96xf32> to vector<8x32xf32>
    %218 = vector.extract_strided_slice %200 {offsets = [0, 64], sizes = [8, 32], strides = [1, 1]} : vector<8x96xf32> to vector<8x32xf32>
    %219 = vector.broadcast %10 : vector<1x32xf32> to vector<8x32xf32>
    %220 = arith.addf %218, %219 : vector<8x32xf32>
    %221 = arith.mulf %208, %220 : vector<8x32xf32>
    %222 = arith.addf %217, %221 : vector<8x32xf32>
    %223 = math.tanh %222 : vector<8x32xf32>
    %cst_35 = arith.constant 1.000000e+00 : f32
    %224 = vector.broadcast %cst_35 : f32 to vector<8x32xf32>
    %225 = arith.subf %224, %216 : vector<8x32xf32>
    %226 = arith.mulf %225, %223 : vector<8x32xf32>
    %227 = arith.mulf %216, %197 : vector<8x32xf32>
    %228 = arith.addf %226, %227 : vector<8x32xf32>
    %229 = vector.extract_strided_slice %8 {offsets = [56, 0], sizes = [8, 96], strides = [1, 1]} : vector<64x96xf32> to vector<8x96xf32>
    %230 = arith.truncf %228 : vector<8x32xf32> to vector<8x32xbf16>
    %cst_36 = arith.constant dense<0.000000e+00> : vector<8x96xf32>
    %231 = tpu.matmul %230, %9, %cst_36 {dimension_numbers = #tpu.dot_dimension_numbers<[1], [0], [0], [1], [0, 0, 1, 1], [], []>} : vector<8x32xbf16>, vector<32x96xbf16>, vector<8x96xf32> -> vector<8x96xf32>
    %232 = vector.extract_strided_slice %229 {offsets = [0, 0], sizes = [8, 32], strides = [1, 1]} : vector<8x96xf32> to vector<8x32xf32>
    %233 = vector.extract_strided_slice %231 {offsets = [0, 0], sizes = [8, 32], strides = [1, 1]} : vector<8x96xf32> to vector<8x32xf32>
    %234 = arith.addf %232, %233 : vector<8x32xf32>
    %235 = arith.negf %234 : vector<8x32xf32>
    %236 = math.exp %235 : vector<8x32xf32>
    %cst_37 = arith.constant 1.000000e+00 : f32
    %237 = vector.broadcast %cst_37 : f32 to vector<8x32xf32>
    %238 = arith.addf %237, %236 : vector<8x32xf32>
    %239 = arith.divf %237, %238 : vector<8x32xf32>
    %240 = vector.extract_strided_slice %229 {offsets = [0, 32], sizes = [8, 32], strides = [1, 1]} : vector<8x96xf32> to vector<8x32xf32>
    %241 = vector.extract_strided_slice %231 {offsets = [0, 32], sizes = [8, 32], strides = [1, 1]} : vector<8x96xf32> to vector<8x32xf32>
    %242 = arith.addf %240, %241 : vector<8x32xf32>
    %243 = arith.negf %242 : vector<8x32xf32>
    %244 = math.exp %243 : vector<8x32xf32>
    %cst_38 = arith.constant 1.000000e+00 : f32
    %245 = vector.broadcast %cst_38 : f32 to vector<8x32xf32>
    %246 = arith.addf %245, %244 : vector<8x32xf32>
    %247 = arith.divf %245, %246 : vector<8x32xf32>
    %248 = vector.extract_strided_slice %229 {offsets = [0, 64], sizes = [8, 32], strides = [1, 1]} : vector<8x96xf32> to vector<8x32xf32>
    %249 = vector.extract_strided_slice %231 {offsets = [0, 64], sizes = [8, 32], strides = [1, 1]} : vector<8x96xf32> to vector<8x32xf32>
    %250 = vector.broadcast %10 : vector<1x32xf32> to vector<8x32xf32>
    %251 = arith.addf %249, %250 : vector<8x32xf32>
    %252 = arith.mulf %239, %251 : vector<8x32xf32>
    %253 = arith.addf %248, %252 : vector<8x32xf32>
    %254 = math.tanh %253 : vector<8x32xf32>
    %cst_39 = arith.constant 1.000000e+00 : f32
    %255 = vector.broadcast %cst_39 : f32 to vector<8x32xf32>
    %256 = arith.subf %255, %247 : vector<8x32xf32>
    %257 = arith.mulf %256, %254 : vector<8x32xf32>
    %258 = arith.mulf %247, %228 : vector<8x32xf32>
    %259 = arith.addf %257, %258 : vector<8x32xf32>
    %260 = arith.truncf %259 : vector<8x32xf32> to vector<8x32xbf16>
    %c0_40 = arith.constant 0 : index
    %c0_41 = arith.constant 0 : index
    %261 = vector.load %arg4[%c0_40, %c0_41] : memref<32x128xbf16, #tpu.memory_space<vmem>>, vector<32x128xbf16>
    %cst_42 = arith.constant dense<0.000000e+00> : vector<8x128xf32>
    %262 = tpu.matmul %260, %261, %cst_42 {dimension_numbers = #tpu.dot_dimension_numbers<[1], [0], [0], [1], [0, 0, 1, 1], [], []>} : vector<8x32xbf16>, vector<32x128xbf16>, vector<8x128xf32> -> vector<8x128xf32>
    %c0_43 = arith.constant 0 : index
    %c0_44 = arith.constant 0 : index
    %263 = vector.load %arg5[%c0_43, %c0_44] : memref<1x128xf32, #tpu.memory_space<vmem>>, vector<1x128xf32>
    %264 = vector.broadcast %263 : vector<1x128xf32> to vector<8x128xf32>
    %265 = arith.addf %262, %264 : vector<8x128xf32>
    %cst_45 = arith.constant 0.000000e+00 : f32
    %266 = vector.broadcast %cst_45 : f32 to vector<8x128xf32>
    %267 = arith.maximumf %265, %266 : vector<8x128xf32>
    %268 = tpu.iota {dimensions = array<i32: 1>} : vector<8x128xi32>
    %c8_i32 = arith.constant 8 : i32
    %269 = vector.broadcast %c8_i32 : i32 to vector<8x128xi32>
    %270 = arith.cmpi slt, %268, %269 : vector<8x128xi32>
    %cst_46 = arith.constant -1.000000e+30 : f32
    %271 = vector.broadcast %cst_46 : f32 to vector<8x128xf32>
    %272 = arith.select %270, %267, %271 : vector<8x128xi1>, vector<8x128xf32>
    %cst_47 = arith.constant dense<0xFF800000> : vector<8xf32>
    %273 = vector.multi_reduction <maximumf>, %272, %cst_47 [1] : vector<8x128xf32> to vector<8xf32>
    %274 = vector.shape_cast %273 : vector<8xf32> to vector<8x1xf32>
    %275 = vector.broadcast %274 : vector<8x1xf32> to vector<8x128xf32>
    %276 = arith.subf %272, %275 : vector<8x128xf32>
    %277 = math.exp %276 : vector<8x128xf32>
    %cst_48 = arith.constant dense<0.000000e+00> : vector<8xf32>
    %278 = vector.multi_reduction <add>, %277, %cst_48 [1] : vector<8x128xf32> to vector<8xf32>
    %279 = vector.shape_cast %278 : vector<8xf32> to vector<8x1xf32>
    %280 = tpu.reciprocal %279 : vector<8x1xf32> -> vector<8x1xf32>
    %281 = vector.broadcast %280 : vector<8x1xf32> to vector<8x128xf32>
    %282 = arith.mulf %277, %281 : vector<8x128xf32>
    %c0_49 = arith.constant 0 : index
    %c0_50 = arith.constant 0 : index
    %283 = vector.load %arg6[%c0_49, %c0_50] : memref<8x128xf32, #tpu.memory_space<vmem>>, vector<8x128xf32>
    tpu.vector_store %arg6[%c0_49, %c0_50], %282 {strides = array<i32>} : memref<8x128xf32, #tpu.memory_space<vmem>>, vector<8x128xf32>,
    return
  }
}

</mosaic_0001>

<llo_original>
// kernel: surname_classifier_forward.1
$region0: #{surname_classifier_forward.1}
  #allocation0 [shape = 'u32[]', space=smem, size = 0x4, offset = 0x4, fixed_abs, tag = 'smem constant byte address 0x4 - core index']
  #allocation1 [shape = 'u32[72,128]{1,0:T(1,128)}', space=vmem, size = 0x9000, scoped, tag = 'internal scratch']
  %s0 = inlined_call_operand.vmem [shape: s32[64,1], index: 0, kind: input, shape index: {}]
  %s1 = inlined_call_operand.vmem [shape: bf16[30,96], index: 1, kind: input, shape index: {}]
  %s2 = inlined_call_operand.vmem [shape: bf16[32,96], index: 2, kind: input, shape index: {}]
  %s3 = inlined_call_operand.vmem [shape: f32[1,32], index: 3, kind: input, shape index: {}]
  %s4 = inlined_call_operand.vmem [shape: bf16[32,128], index: 4, kind: input, shape index: {}]
  %s5 = inlined_call_operand.vmem [shape: f32[1,128], index: 5, kind: input, shape index: {}]
  %s6 = inlined_call_operand.vmem [shape: f32[8,128], index: 6, kind: output, shape index: {}]
  %s7 = sld [smem:[#allocation0]]
  $region34: #{surname_classifier_forward.1} parent=0
    _
  %s9 = ssub.s32 1, %s7
  %s10 = scalar_select 0, %s9, %s7
  // Predicated region
  $region2: #{surname_classifier_forward.1} parent=0 // pred_check
    _
  $region3: #{surname_classifier_forward.1} parent=0 // pred_check_branch
    %12 = sbr.rel (0) target = $region5
  $region4: #{surname_classifier_forward.1} parent=0 // pred_region
    _
  $region5: #{surname_classifier_forward.1} parent=0 // pred_fallthru
    _
  // Predicated region
  $region6: #{surname_classifier_forward.1} parent=0 // pred_check
    _
  $region7: #{surname_classifier_forward.1} parent=0 // pred_check_branch
    %14 = sbr.rel (0) target = $region9
  $region8: #{surname_classifier_forward.1} parent=0 // pred_region
    _
  $region9: #{surname_classifier_forward.1} parent=0 // pred_fallthru
    _
  // Predicated region
  $region10: #{surname_classifier_forward.1} parent=0 // pred_check
    _
  $region11: #{surname_classifier_forward.1} parent=0 // pred_check_branch
    %16 = sbr.rel (0) target = $region13
  $region12: #{surname_classifier_forward.1} parent=0 // pred_region
    _
  $region13: #{surname_classifier_forward.1} parent=0 // pred_fallthru
    _
  // Predicated region
  $region14: #{surname_classifier_forward.1} parent=0 // pred_check
    _
  $region15: #{surname_classifier_forward.1} parent=0 // pred_check_branch
    %18 = sbr.rel (0) target = $region17
  $region16: #{surname_classifier_forward.1} parent=0 // pred_region
    _
  $region17: #{surname_classifier_forward.1} parent=0 // pred_fallthru
    _
  // Predicated region
  $region18: #{surname_classifier_forward.1} parent=0 // pred_check
    _
  $region19: #{surname_classifier_forward.1} parent=0 // pred_check_branch
    %20 = sbr.rel (0) target = $region21
  $region20: #{surname_classifier_forward.1} parent=0 // pred_region
    _
  $region21: #{surname_classifier_forward.1} parent=0 // pred_fallthru
    _
  // Predicated region
  $region22: #{surname_classifier_forward.1} parent=0 // pred_check
    _
  $region23: #{surname_classifier_forward.1} parent=0 // pred_check_branch
    %22 = sbr.rel (0) target = $region25
  $region24: #{surname_classifier_forward.1} parent=0 // pred_region
    _
  $region25: #{surname_classifier_forward.1} parent=0 // pred_fallthru
    _
  %v24 = vld [vmem:[%s0] sm:$0xff]
  %v25 = vld [vmem:[%s0 + $0x8] sm:$0xff]
  %v26 = vld [vmem:[%s0 + $0x10] sm:$0xff]
  %v27 = vld [vmem:[%s0 + $0x18] sm:$0xff]
  %v28 = vld [vmem:[%s0 + $0x20] sm:$0xff]
  %v29 = vld [vmem:[%s0 + $0x28] sm:$0xff]
  %v30 = vld [vmem:[%s0 + $0x30] sm:$0xff]
  %v31 = vld [vmem:[%s0 + $0x38] sm:$0xff]
  %v32 = vlaneseq
  %v33 = vand.u32 %v32, 127
  %34 = vset.pattern.permute.xlu0 0
  %35 = vperm.xlu0 %34, %v24
  %v36 = vpop.permute.xlu0 %35
  %37 = vset.pattern.permute.xlu0 0
  %38 = vperm.xlu0 %37, %v25
  %v39 = vpop.permute.xlu0 %38
  %40 = vset.pattern.permute.xlu0 0
  %41 = vperm.xlu0 %40, %v26
  %v42 = vpop.permute.xlu0 %41
  %43 = vset.pattern.permute.xlu0 0
  %44 = vperm.xlu0 %43, %v27
  %v45 = vpop.permute.xlu0 %44
  %46 = vset.pattern.permute.xlu0 0
  %47 = vperm.xlu0 %46, %v28
  %v48 = vpop.permute.xlu0 %47
  %49 = vset.pattern.permute.xlu0 0
  %50 = vperm.xlu0 %49, %v29
  %v51 = vpop.permute.xlu0 %50
  %52 = vset.pattern.permute.xlu0 0
  %53 = vperm.xlu0 %52, %v30
  %v54 = vpop.permute.xlu0 %53
  %55 = vset.pattern.permute.xlu0 0
  %56 = vperm.xlu0 %55, %v31
  %v57 = vpop.permute.xlu0 %56
  %vm58 = vcmp.eq.s32.totalorder %v33, %v36
  %vm59 = vcmp.eq.s32.totalorder %v33, %v39
  %vm60 = vcmp.eq.s32.totalorder %v33, %v42
  %vm61 = vcmp.eq.s32.totalorder %v33, %v45
  %vm62 = vcmp.eq.s32.totalorder %v33, %v48
  %vm63 = vcmp.eq.s32.totalorder %v33, %v51
  %vm64 = vcmp.eq.s32.totalorder %v33, %v54
  %vm65 = vcmp.eq.s32.totalorder %v33, %v57
  %v66 = vsel %vm58, 1, 0
  %v67 = vsel %vm59, 1, 0
  %v68 = vsel %vm60, 1, 0
  %v69 = vsel %vm61, 1, 0
  %v70 = vsel %vm62, 1, 0
  %v71 = vsel %vm63, 1, 0
  %v72 = vsel %vm64, 1, 0
  %v73 = vsel %vm65, 1, 0
  %v74 = vcvt.s32.f32 %v66
  %v75 = vcvt.s32.f32 %v67
  %v76 = vcvt.s32.f32 %v68
  %v77 = vcvt.s32.f32 %v69
  %v78 = vcvt.s32.f32 %v70
  %v79 = vcvt.s32.f32 %v71
  %v80 = vcvt.s32.f32 %v72
  %v81 = vcvt.s32.f32 %v73
  %v82 = vpack.c.bf16 %v75, %v74
  %v83 = vpack.c.bf16 %v77, %v76
  %v84 = vpack.c.bf16 %v79, %v78
  %v85 = vpack.c.bf16 %v81, %v80
  %v86 = vld [vmem:[%s1] sm:$0xf]
  %v87 = vld [vmem:[%s1 + $0x4] sm:$0xf]
  %v88 = vld [vmem:[%s1 + $0x8] sm:$0xf]
  %v89 = vld [vmem:[%s1 + $0xc] sm:$0x7]
  %v94 = vunpack.c.l.b16 %v86
  %v95 = vunpack.c.l.b16 %v87
  %v96 = vunpack.c.l.b16 %v88
  %v97 = vunpack.c.l.b16 %v89
  %v98 = vpack.c.b16 %v95, %v94
  %v99 = vpack.c.b16 %v97, %v96
  %vm101 = vcmask 244736
  %v103 = vsel %vm101, %v82, 0
  %v106 = vsel %vm101, %v83, 0
  %v109 = vsel %vm101, %v84, 0
  %v112 = vsel %vm101, %v85, 0
  %vm114 = vcmask 1046528
  %v116 = vsel %vm114, %v99, 0
  %118 = vmatpush.bf16.msra.mxu0 0
  %119 = vmatpush.bf16.msra.mxu0 0
  %120 = vmatpush.bf16.msra.mxu0 0
  %121 = vmatpush.bf16.msra.mxu0 0
  %122 = vmatpush.bf16.msra.mxu0 0
  %123 = vmatpush.bf16.msra.mxu0 0
  %124 = vmatpush.bf16.msra.mxu0 %v116
  %125 = vmatpush.bf16.msra.mxu0 %v98
  %126 = vmatmul.bf16.gmra.mxu0 %v103
  %v127 = vpop.f32.mrf.mxu0
  %v128 = vadd.f32 0.0, %v127
  %v129 = vpop.f32.mrf.mxu0
  %v130 = vadd.f32 0.0, %v129
  %131 = vmatmul.bf16.gmra.mxu0 %v106
  %v132 = vpop.f32.mrf.mxu0
  %v133 = vadd.f32 0.0, %v132
  %v134 = vpop.f32.mrf.mxu0
  %v135 = vadd.f32 0.0, %v134
  %136 = vmatmul.bf16.gmra.mxu0 %v109
  %v137 = vpop.f32.mrf.mxu0
  %v138 = vadd.f32 0.0, %v137
  %v139 = vpop.f32.mrf.mxu0
  %v140 = vadd.f32 0.0, %v139
  %141 = vmatmul.bf16.gmra.mxu0 %v112
  %v142 = vpop.f32.mrf.mxu0
  %v143 = vadd.f32 0.0, %v142
  %v144 = vpop.f32.mrf.mxu0
  %v145 = vadd.f32 0.0, %v144
  %146 = vdwg.mxu0
  %v147 = vld [vmem:[%s2] sm:$0xf]
  %v148 = vld [vmem:[%s2 + $0x4] sm:$0xf]
  %v149 = vld [vmem:[%s2 + $0x8] sm:$0xf]
  %v150 = vld [vmem:[%s2 + $0xc] sm:$0xf]
  %v151 = vld [vmem:[%s3] sm:$0x1]
  %v156 = vunpack.c.l.b16 %v147
  %v157 = vunpack.c.l.b16 %v148
  %v158 = vunpack.c.l.b16 %v149
  %v159 = vunpack.c.l.b16 %v150
  %v160 = vpack.c.b16 %v157, %v156
  %v161 = vpack.c.b16 %v159, %v158
  %vm164 = vcmask 261120
  %v166 = vsel %vm164, 0, 0
  %168 = vmatpush.bf16.msra.mxu0 0
  %169 = vmatpush.bf16.msra.mxu0 0
  %170 = vmatpush.bf16.msra.mxu0 0
  %171 = vmatpush.bf16.msra.mxu0 0
  %172 = vmatpush.bf16.msra.mxu0 0
  %173 = vmatpush.bf16.msra.mxu0 0
  %174 = vmatpush.bf16.msra.mxu0 %v161
  %175 = vmatpush.bf16.msra.mxu0 %v160
  %176 = vmatmul.bf16.gmra.mxu0 %v166
  %v177 = vpop.f32.mrf.mxu0
  %v178 = vadd.f32 0.0, %v177
  %v179 = vpop.f32.mrf.mxu0
  %180 = vdwg.mxu0
  %v181 = vadd.f32 %v128, %v178
  %v182 = vxor.u32 %v181, 2147483648
  %v183 = vmul.f32 %v182, 1.442695
  %v184 = vpow.pop %v183
  %v185 = vadd.f32 %v184, 1.0
  %v186 = vrcp.pop %v185
  %v187 = vmul.f32 %v185, %v186
  %v188 = vsub.f32 1.0, %v187
  %v189 = vmul.f32 %v186, %v188
  %v190 = vadd.f32 %v186, %v189
  %vm191 = vweird.f32 %v185
  %vm192 = vweird.f32 %v186
  %vm193 = vmor %vm191, %vm192
  %v194 = vsel %vm193, %v186, %v190
  %v195 = vand.u32 2147483647, %v185
  %vm196 = vcmp.eq.f32.partialorder %v195, 8.507059e+37
  %v197 = vand.u32 %v185, 2147483648
  %v198 = vor.u32 1.1754944e-38, %v197
  %v199 = vsel %vm196, %v198, %v194
  %v200 = vmul.f32 1.0, %v199
  %v202 = vperm.slane %v151, 0
  %203 = vrot.lane.b32.xlu0 %v202, 64
  %v204 = vpop.permute.xlu0 %203
  %v206 = vadd.f32 %v178, %v204
  %208 = vrot.lane.b32.xlu0 %v206, 64
  %v209 = vpop.permute.xlu0 %208
  %v211 = vmul.f32 %v200, %v209
  %213 = vrot.lane.b32.xlu0 %v211, 64
  %v214 = vpop.permute.xlu0 %213
  %v216 = vadd.f32 %v128, %v214
  %v217 = vtanh.pop %v216
  %v218 = vsub.f32 1.0, %v200
  %220 = vrot.lane.b32.xlu0 %v217, 96
  %v221 = vpop.permute.xlu0 %220
  %v223 = vmul.f32 %v218, %v221
  %v224 = vmul.f32 %v200, 0.0
  %v225 = vadd.f32 %v223, %v224
  %v226 = vpack.c.bf16 %v225, %v225
  %228 = vrot.lane.b32.xlu0 %v226, 96
  %v229 = vpop.permute.xlu0 %228
  %v231 = vsel %vm164, %v229, 0
  %233 = vmatpush.bf16.msra.mxu0 0
  %234 = vmatpush.bf16.msra.mxu0 0
  %235 = vmatpush.bf16.msra.mxu0 0
  %236 = vmatpush.bf16.msra.mxu0 0
  %237 = vmatpush.bf16.msra.mxu0 0
  %238 = vmatpush.bf16.msra.mxu0 0
  %239 = vmatpush.bf16.msra.mxu0 %v161
  %240 = vmatpush.bf16.msra.mxu0 %v160
  %241 = vmatmul.bf16.gmra.mxu0 %v231
  %v242 = vpop.f32.mrf.mxu0
  %v243 = vadd.f32 0.0, %v242
  %v244 = vpop.f32.mrf.mxu0
  %245 = vdwg.mxu0
  %v246 = vadd.f32 %v130, %v243
  %v247 = vxor.u32 %v246, 2147483648
  %v248 = vmul.f32 %v247, 1.442695
  %v249 = vpow.pop %v248
  %v250 = vadd.f32 %v249, 1.0
  %v251 = vrcp.pop %v250
  %v252 = vmul.f32 %v250, %v251
  %v253 = vsub.f32 1.0, %v252
  %v254 = vmul.f32 %v251, %v253
  %v255 = vadd.f32 %v251, %v254
  %vm256 = vweird.f32 %v250
  %vm257 = vweird.f32 %v251
  %vm258 = vmor %vm256, %vm257
  %v259 = vsel %vm258, %v251, %v255
  %v260 = vand.u32 2147483647, %v250
  %vm261 = vcmp.eq.f32.partialorder %v260, 8.507059e+37
  %v262 = vand.u32 %v250, 2147483648
  %v263 = vor.u32 1.1754944e-38, %v262
  %v264 = vsel %vm261, %v263, %v259
  %v265 = vmul.f32 1.0, %v264
  %v266 = vadd.f32 %v243, %v204
  %268 = vrot.lane.b32.xlu0 %v266, 64
  %v269 = vpop.permute.xlu0 %268
  %v271 = vmul.f32 %v265, %v269
  %273 = vrot.lane.b32.xlu0 %v271, 64
  %v274 = vpop.permute.xlu0 %273
  %v276 = vadd.f32 %v130, %v274
  %v277 = vtanh.pop %v276
  %v278 = vsub.f32 1.0, %v265
  %280 = vrot.lane.b32.xlu0 %v277, 96
  %v281 = vpop.permute.xlu0 %280
  %v283 = vmul.f32 %v278, %v281
  %v284 = vmul.f32 %v265, %v225
  %v285 = vadd.f32 %v283, %v284
  %v286 = vpack.c.bf16 %v285, %v285
  %288 = vrot.lane.b32.xlu0 %v286, 96
  %v289 = vpop.permute.xlu0 %288
  %v291 = vsel %vm164, %v289, 0
  %293 = vmatpush.bf16.msra.mxu0 0
  %294 = vmatpush.bf16.msra.mxu0 0
  %295 = vmatpush.bf16.msra.mxu0 0
  %296 = vmatpush.bf16.msra.mxu0 0
  %297 = vmatpush.bf16.msra.mxu0 0
  %298 = vmatpush.bf16.msra.mxu0 0
  %299 = vmatpush.bf16.msra.mxu0 %v161
  %300 = vmatpush.bf16.msra.mxu0 %v160
  %301 = vmatmul.bf16.gmra.mxu0 %v291
  %v302 = vpop.f32.mrf.mxu0
  %v303 = vadd.f32 0.0, %v302
  %v304 = vpop.f32.mrf.mxu0
  %305 = vdwg.mxu0
  %v306 = vadd.f32 %v133, %v303
  %v307 = vxor.u32 %v306, 2147483648
  %v308 = vmul.f32 %v307, 1.442695
  %v309 = vpow.pop %v308
  %v310 = vadd.f32 %v309, 1.0
  %v311 = vrcp.pop %v310
  %v312 = vmul.f32 %v310, %v311
  %v313 = vsub.f32 1.0, %v312
  %v314 = vmul.f32 %v311, %v313
  %v315 = vadd.f32 %v311, %v314
  %vm316 = vweird.f32 %v310
  %vm317 = vweird.f32 %v311
  %vm318 = vmor %vm316, %vm317
  %v319 = vsel %vm318, %v311, %v315
  %v320 = vand.u32 2147483647, %v310
  %vm321 = vcmp.eq.f32.partialorder %v320, 8.507059e+37
  %v322 = vand.u32 %v310, 2147483648
  %v323 = vor.u32 1.1754944e-38, %v322
  %v324 = vsel %vm321, %v323, %v319
  %v325 = vmul.f32 1.0, %v324
  %v326 = vadd.f32 %v303, %v204
  %328 = vrot.lane.b32.xlu0 %v326, 64
  %v329 = vpop.permute.xlu0 %328
  %v331 = vmul.f32 %v325, %v329
  %333 = vrot.lane.b32.xlu0 %v331, 64
  %v334 = vpop.permute.xlu0 %333
  %v336 = vadd.f32 %v133, %v334
  %v337 = vtanh.pop %v336
  %v338 = vsub.f32 1.0, %v325
  %340 = vrot.lane.b32.xlu0 %v337, 96
  %v341 = vpop.permute.xlu0 %340
  %v343 = vmul.f32 %v338, %v341
  %v344 = vmul.f32 %v325, %v285
  %v345 = vadd.f32 %v343, %v344
  %v346 = vpack.c.bf16 %v345, %v345
  %348 = vrot.lane.b32.xlu0 %v346, 96
  %v349 = vpop.permute.xlu0 %348
  %v351 = vsel %vm164, %v349, 0
  %353 = vmatpush.bf16.msra.mxu0 0
  %354 = vmatpush.bf16.msra.mxu0 0
  %355 = vmatpush.bf16.msra.mxu0 0
  %356 = vmatpush.bf16.msra.mxu0 0
  %357 = vmatpush.bf16.msra.mxu0 0
  %358 = vmatpush.bf16.msra.mxu0 0
  %359 = vmatpush.bf16.msra.mxu0 %v161
  %360 = vmatpush.bf16.msra.mxu0 %v160
  %361 = vmatmul.bf16.gmra.mxu0 %v351
  %v362 = vpop.f32.mrf.mxu0
  %v363 = vadd.f32 0.0, %v362
  %v364 = vpop.f32.mrf.mxu0
  %365 = vdwg.mxu0
  %v366 = vadd.f32 %v135, %v363
  %v367 = vxor.u32 %v366, 2147483648
  %v368 = vmul.f32 %v367, 1.442695
  %v369 = vpow.pop %v368
  %v370 = vadd.f32 %v369, 1.0
  %v371 = vrcp.pop %v370
  %v372 = vmul.f32 %v370, %v371
  %v373 = vsub.f32 1.0, %v372
  %v374 = vmul.f32 %v371, %v373
  %v375 = vadd.f32 %v371, %v374
  %vm376 = vweird.f32 %v370
  %vm377 = vweird.f32 %v371
  %vm378 = vmor %vm376, %vm377
  %v379 = vsel %vm378, %v371, %v375
  %v380 = vand.u32 2147483647, %v370
  %vm381 = vcmp.eq.f32.partialorder %v380, 8.507059e+37
  %v382 = vand.u32 %v370, 2147483648
  %v383 = vor.u32 1.1754944e-38, %v382
  %v384 = vsel %vm381, %v383, %v379
  %v385 = vmul.f32 1.0, %v384
  %v386 = vadd.f32 %v363, %v204
  %388 = vrot.lane.b32.xlu0 %v386, 64
  %v389 = vpop.permute.xlu0 %388
  %v391 = vmul.f32 %v385, %v389
  %393 = vrot.lane.b32.xlu0 %v391, 64
  %v394 = vpop.permute.xlu0 %393
  %v396 = vadd.f32 %v135, %v394
  %v397 = vtanh.pop %v396
  %v398 = vsub.f32 1.0, %v385
  %400 = vrot.lane.b32.xlu0 %v397, 96
  %v401 = vpop.permute.xlu0 %400
  %v403 = vmul.f32 %v398, %v401
  %v404 = vmul.f32 %v385, %v345
  %v405 = vadd.f32 %v403, %v404
  %v406 = vpack.c.bf16 %v405, %v405
  %408 = vrot.lane.b32.xlu0 %v406, 96
  %v409 = vpop.permute.xlu0 %408
  %v411 = vsel %vm164, %v409, 0
  %413 = vmatpush.bf16.msra.mxu0 0
  %414 = vmatpush.bf16.msra.mxu0 0
  %415 = vmatpush.bf16.msra.mxu0 0
  %416 = vmatpush.bf16.msra.mxu0 0
  %417 = vmatpush.bf16.msra.mxu0 0
  %418 = vmatpush.bf16.msra.mxu0 0
  %419 = vmatpush.bf16.msra.mxu0 %v161
  %420 = vmatpush.bf16.msra.mxu0 %v160
  %421 = vmatmul.bf16.gmra.mxu0 %v411
  %v422 = vpop.f32.mrf.mxu0
  %v423 = vadd.f32 0.0, %v422
  %v424 = vpop.f32.mrf.mxu0
  %425 = vdwg.mxu0
  %v426 = vadd.f32 %v138, %v423
  %v427 = vxor.u32 %v426, 2147483648
  %v428 = vmul.f32 %v427, 1.442695
  %v429 = vpow.pop %v428
  %v430 = vadd.f32 %v429, 1.0
  %v431 = vrcp.pop %v430
  %v432 = vmul.f32 %v430, %v431
  %v433 = vsub.f32 1.0, %v432
  %v434 = vmul.f32 %v431, %v433
  %v435 = vadd.f32 %v431, %v434
  %vm436 = vweird.f32 %v430
  %vm437 = vweird.f32 %v431
  %vm438 = vmor %vm436, %vm437
  %v439 = vsel %vm438, %v431, %v435
  %v440 = vand.u32 2147483647, %v430
  %vm441 = vcmp.eq.f32.partialorder %v440, 8.507059e+37
  %v442 = vand.u32 %v430, 2147483648
  %v443 = vor.u32 1.1754944e-38, %v442
  %v444 = vsel %vm441, %v443, %v439
  %v445 = vmul.f32 1.0, %v444
  %v446 = vadd.f32 %v423, %v204
  %448 = vrot.lane.b32.xlu0 %v446, 64
  %v449 = vpop.permute.xlu0 %448
  %v451 = vmul.f32 %v445, %v449
  %453 = vrot.lane.b32.xlu0 %v451, 64
  %v454 = vpop.permute.xlu0 %453
  %v456 = vadd.f32 %v138, %v454
  %v457 = vtanh.pop %v456
  %v458 = vsub.f32 1.0, %v445
  %460 = vrot.lane.b32.xlu0 %v457, 96
  %v461 = vpop.permute.xlu0 %460
  %v463 = vmul.f32 %v458, %v461
  %v464 = vmul.f32 %v445, %v405
  %v465 = vadd.f32 %v463, %v464
  %v466 = vpack.c.bf16 %v465, %v465
  %468 = vrot.lane.b32.xlu0 %v466, 96
  %v469 = vpop.permute.xlu0 %468
  %v471 = vsel %vm164, %v469, 0
  %473 = vmatpush.bf16.msra.mxu0 0
  %474 = vmatpush.bf16.msra.mxu0 0
  %475 = vmatpush.bf16.msra.mxu0 0
  %476 = vmatpush.bf16.msra.mxu0 0
  %477 = vmatpush.bf16.msra.mxu0 0
  %478 = vmatpush.bf16.msra.mxu0 0
  %479 = vmatpush.bf16.msra.mxu0 %v161
  %480 = vmatpush.bf16.msra.mxu0 %v160
  %481 = vmatmul.bf16.gmra.mxu0 %v471
  %v482 = vpop.f32.mrf.mxu0
  %v483 = vadd.f32 0.0, %v482
  %v484 = vpop.f32.mrf.mxu0
  %485 = vdwg.mxu0
  %v486 = vadd.f32 %v140, %v483
  %v487 = vxor.u32 %v486, 2147483648
  %v488 = vmul.f32 %v487, 1.442695
  %v489 = vpow.pop %v488
  %v490 = vadd.f32 %v489, 1.0
  %v491 = vrcp.pop %v490
  %v492 = vmul.f32 %v490, %v491
  %v493 = vsub.f32 1.0, %v492
  %v494 = vmul.f32 %v491, %v493
  %v495 = vadd.f32 %v491, %v494
  %vm496 = vweird.f32 %v490
  %vm497 = vweird.f32 %v491
  %vm498 = vmor %vm496, %vm497
  %v499 = vsel %vm498, %v491, %v495
  %v500 = vand.u32 2147483647, %v490
  %vm501 = vcmp.eq.f32.partialorder %v500, 8.507059e+37
  %v502 = vand.u32 %v490, 2147483648
  %v503 = vor.u32 1.1754944e-38, %v502
  %v504 = vsel %vm501, %v503, %v499
  %v505 = vmul.f32 1.0, %v504
  %v506 = vadd.f32 %v483, %v204
  %508 = vrot.lane.b32.xlu0 %v506, 64
  %v509 = vpop.permute.xlu0 %508
  %v511 = vmul.f32 %v505, %v509
  %513 = vrot.lane.b32.xlu0 %v511, 64
  %v514 = vpop.permute.xlu0 %513
  %v516 = vadd.f32 %v140, %v514
  %v517 = vtanh.pop %v516
  %v518 = vsub.f32 1.0, %v505
  %520 = vrot.lane.b32.xlu0 %v517, 96
  %v521 = vpop.permute.xlu0 %520
  %v523 = vmul.f32 %v518, %v521
  %v524 = vmul.f32 %v505, %v465
  %v525 = vadd.f32 %v523, %v524
  %v526 = vpack.c.bf16 %v525, %v525
  %528 = vrot.lane.b32.xlu0 %v526, 96
  %v529 = vpop.permute.xlu0 %528
  %v531 = vsel %vm164, %v529, 0
  %533 = vmatpush.bf16.msra.mxu0 0
  %534 = vmatpush.bf16.msra.mxu0 0
  %535 = vmatpush.bf16.msra.mxu0 0
  %536 = vmatpush.bf16.msra.mxu0 0
  %537 = vmatpush.bf16.msra.mxu0 0
  %538 = vmatpush.bf16.msra.mxu0 0
  %539 = vmatpush.bf16.msra.mxu0 %v161
  %540 = vmatpush.bf16.msra.mxu0 %v160
  %541 = vmatmul.bf16.gmra.mxu0 %v531
  %v542 = vpop.f32.mrf.mxu0
  %v543 = vadd.f32 0.0, %v542
  %v544 = vpop.f32.mrf.mxu0
  %545 = vdwg.mxu0
  %v546 = vadd.f32 %v143, %v543
  %v547 = vxor.u32 %v546, 2147483648
  %v548 = vmul.f32 %v547, 1.442695
  %v549 = vpow.pop %v548
  %v550 = vadd.f32 %v549, 1.0
  %v551 = vrcp.pop %v550
  %v552 = vmul.f32 %v550, %v551
  %v553 = vsub.f32 1.0, %v552
  %v554 = vmul.f32 %v551, %v553
  %v555 = vadd.f32 %v551, %v554
  %vm556 = vweird.f32 %v550
  %vm557 = vweird.f32 %v551
  %vm558 = vmor %vm556, %vm557
  %v559 = vsel %vm558, %v551, %v555
  %v560 = vand.u32 2147483647, %v550
  %vm561 = vcmp.eq.f32.partialorder %v560, 8.507059e+37
  %v562 = vand.u32 %v550, 2147483648
  %v563 = vor.u32 1.1754944e-38, %v562
  %v564 = vsel %vm561, %v563, %v559
  %v565 = vmul.f32 1.0, %v564
  %v566 = vadd.f32 %v543, %v204
  %568 = vrot.lane.b32.xlu0 %v566, 64
  %v569 = vpop.permute.xlu0 %568
  %v571 = vmul.f32 %v565, %v569
  %573 = vrot.lane.b32.xlu0 %v571, 64
  %v574 = vpop.permute.xlu0 %573
  %v576 = vadd.f32 %v143, %v574
  %v577 = vtanh.pop %v576
  %v578 = vsub.f32 1.0, %v565
  %580 = vrot.lane.b32.xlu0 %v577, 96
  %v581 = vpop.permute.xlu0 %580
  %v583 = vmul.f32 %v578, %v581
  %v584 = vmul.f32 %v565, %v525
  %v585 = vadd.f32 %v583, %v584
  %v586 = vpack.c.bf16 %v585, %v585
  %588 = vrot.lane.b32.xlu0 %v586, 96
  %v589 = vpop.permute.xlu0 %588
  %v591 = vsel %vm164, %v589, 0
  %593 = vmatpush.bf16.msra.mxu0 0
  %594 = vmatpush.bf16.msra.mxu0 0
  %595 = vmatpush.bf16.msra.mxu0 0
  %596 = vmatpush.bf16.msra.mxu0 0
  %597 = vmatpush.bf16.msra.mxu0 0
  %598 = vmatpush.bf16.msra.mxu0 0
  %599 = vmatpush.bf16.msra.mxu0 %v161
  %600 = vmatpush.bf16.msra.mxu0 %v160
  %601 = vmatmul.bf16.gmra.mxu0 %v591
  %v602 = vpop.f32.mrf.mxu0
  %v603 = vadd.f32 0.0, %v602
  %v604 = vpop.f32.mrf.mxu0
  %605 = vdwg.mxu0
  %v606 = vadd.f32 %v145, %v603
  %v607 = vxor.u32 %v606, 2147483648
  %v608 = vmul.f32 %v607, 1.442695
  %v609 = vpow.pop %v608
  %v610 = vadd.f32 %v609, 1.0
  %v611 = vrcp.pop %v610
  %v612 = vmul.f32 %v610, %v611
  %v613 = vsub.f32 1.0, %v612
  %v614 = vmul.f32 %v611, %v613
  %v615 = vadd.f32 %v611, %v614
  %vm616 = vweird.f32 %v610
  %vm617 = vweird.f32 %v611
  %vm618 = vmor %vm616, %vm617
  %v619 = vsel %vm618, %v611, %v615
  %v620 = vand.u32 2147483647, %v610
  %vm621 = vcmp.eq.f32.partialorder %v620, 8.507059e+37
  %v622 = vand.u32 %v610, 2147483648
  %v623 = vor.u32 1.1754944e-38, %v622
  %v624 = vsel %vm621, %v623, %v619
  %v625 = vmul.f32 1.0, %v624
  %v626 = vadd.f32 %v603, %v204
  %628 = vrot.lane.b32.xlu0 %v626, 64
  %v629 = vpop.permute.xlu0 %628
  %v631 = vmul.f32 %v625, %v629
  %633 = vrot.lane.b32.xlu0 %v631, 64
  %v634 = vpop.permute.xlu0 %633
  %v636 = vadd.f32 %v145, %v634
  %v637 = vtanh.pop %v636
  %v638 = vsub.f32 1.0, %v625
  %640 = vrot.lane.b32.xlu0 %v637, 96
  %v641 = vpop.permute.xlu0 %640
  %v643 = vmul.f32 %v638, %v641
  %v644 = vmul.f32 %v625, %v585
  %v645 = vadd.f32 %v643, %v644
  %v646 = vpack.c.bf16 %v645, %v645
  %v647 = vld [vmem:[%s4] sm:$0xf]
  %v648 = vld [vmem:[%s4 + $0x4] sm:$0xf]
  %v649 = vld [vmem:[%s4 + $0x8] sm:$0xf]
  %v650 = vld [vmem:[%s4 + $0xc] sm:$0xf]
  %v651 = vld [vmem:[%s5] sm:$0x1]
  %v653 = vperm.slane %v651, 0
  %656 = vrot.lane.b32.xlu0 %v646, 96
  %v657 = vpop.permute.xlu0 %656
  %v662 = vunpack.c.l.b16 %v647
  %v663 = vunpack.c.l.b16 %v648
  %v664 = vunpack.c.l.b16 %v649
  %v665 = vunpack.c.l.b16 %v650
  %v666 = vpack.c.b16 %v663, %v662
  %v667 = vpack.c.b16 %v665, %v664
  %v671 = vsel %vm164, %v657, 0
  %673 = vmatpush.bf16.msra.mxu0 0
  %674 = vmatpush.bf16.msra.mxu0 0
  %675 = vmatpush.bf16.msra.mxu0 0
  %676 = vmatpush.bf16.msra.mxu0 0
  %677 = vmatpush.bf16.msra.mxu0 0
  %678 = vmatpush.bf16.msra.mxu0 0
  %679 = vmatpush.bf16.msra.mxu0 %v667
  %680 = vmatpush.bf16.msra.mxu0 %v666
  %681 = vmatmul.bf16.gmra.mxu0 %v671
  %v682 = vpop.f32.mrf.mxu0
  %v683 = vadd.f32 %v653, %v682
  %v684 = vpop.f32.mrf.mxu0
  %685 = vdwg.mxu0
  %v686 = vmax.f32 %v683, 0.0
  %vm687 = vcmp.lt.s32.totalorder %v33, 8
  %v688 = vsel %vm687, %v686, -1e+30
  %689 = vmax.xlane.f32.xlu0 %v688
  %v690 = vpop.xlane.xlu0 %689
  %v691 = vsub.f32 %v688, %v690
  %v692 = vmul.f32 %v691, 1.442695
  %v693 = vpow.pop %v692
  %694 = vadd.xlane.f32.xlu0 %v693
  %v695 = vpop.xlane.xlu0 %694
  %v696 = vrcp.pop %v695
  %v697 = vmul.f32 %v695, %v696
  %v698 = vsub.f32 1.0, %v697
  %v699 = vmul.f32 %v696, %v698
  %v700 = vadd.f32 %v696, %v699
  %vm701 = vweird.f32 %v695
  %vm702 = vweird.f32 %v696
  %vm703 = vmor %vm701, %vm702
  %v704 = vsel %vm703, %v696, %v700
  %v705 = vand.u32 2147483647, %v695
  %vm706 = vcmp.eq.f32.partialorder %v705, 8.507059e+37
  %v707 = vand.u32 %v695, 2147483648
  %v708 = vor.u32 1.1754944e-38, %v707
  %v709 = vsel %vm706, %v708, %v704
  %v710 = vmul.f32 %v693, %v709
  %711 = vst [vmem:[%s6] sm:$0xff] %v710
  // Predicated region
  $region26: #{surname_classifier_forward.1} parent=0 // pred_check
    _
  $region27: #{surname_classifier_forward.1} parent=0 // pred_check_branch
    %713 = sbr.rel (0) target = $region29
  $region28: #{surname_classifier_forward.1} parent=0 // pred_region
    _
  $region29: #{surname_classifier_forward.1} parent=0 // pred_fallthru
    _
  // Predicated region
  $region30: #{surname_classifier_forward.1} parent=0 // pred_check
    _
  $region31: #{surname_classifier_forward.1} parent=0 // pred_check_branch
    %715 = sbr.rel (0) target = $region33
  $region32: #{surname_classifier_forward.1} parent=0 // pred_region
    _
  $region33: #{surname_classifier_forward.1} parent=0 // pred_fallthru
    _

</llo_original>
